<compile_context>
chip_gen: v7x
topology: tpu7x:2x2x1
jax: 0.10.0
libtpu: 0.0.40
codegen_flags: <defaults>
</compile_context>

<pallas_src>
import jax
import jax.numpy as jnp
from jax.experimental import pallas as pl
from jax.experimental.pallas import tpu as pltpu


def _round_up(x, m):
    return (x + m - 1) // m * m


def _cdiv(a, b):
    return -(-a // b)


def _pad_lanes(x, target):
    """Zero-pad the minor (lane) axis of a 2-D value to `target` columns so the
    store is a full-width unmasked vst instead of a masked partial store."""
    cur = x.shape[-1]
    if cur == target:
        return x
    pad = jnp.zeros(x.shape[:-1] + (target - cur,), dtype=x.dtype)
    return jnp.concatenate([x, pad], axis=-1)


def linear_attention_kernel(inp_ref, ctx_ref, wv_ref, wuv_ref, w1t_ref, w2t_ref,
                            h_ref, wc_ref, attn_ref):
    cdt = ctx_ref.dtype
    inp = inp_ref[...]                                   # (tb, D)    input dtype
    ctx = ctx_ref[...]                                   # (tb, L, D) input dtype

    # Fold the per-row attention weight once (f32): w_b = wv + inp * wuv.
    # The u.wu logit term is constant over L and cancels in the softmax.
    w_b = (wv_ref[...].astype(jnp.float32)
           + inp.astype(jnp.float32) * wuv_ref[...].astype(jnp.float32))   # (tb, D)

    # Attention logits: product kept in the ctx dtype (no persistent f32 copy of
    # the (tb,L,D) block), accumulation over D forced to f32.
    scores = jnp.sum(ctx * w_b.astype(cdt)[:, None, :], axis=-1,
                     dtype=jnp.float32)                  # (tb, L) f32, L on lanes

    # Numerically stable softmax over source length.
    scores = scores - jnp.max(scores, axis=-1, keepdims=True)
    e = jnp.exp(scores)
    attn = e / jnp.sum(e, axis=-1, keepdims=True)        # (tb, L) f32

    # Weighted context: product in ctx dtype, f32 accumulation over L (VPU
    # sublane reduce; keeps the MXU free for the projection dots).
    wc = jnp.sum(attn.astype(cdt)[:, :, None] * ctx, axis=1,
                 dtype=jnp.float32)                      # (tb, D) f32

    # h_tilde = tanh(wc @ W1^T + inp @ W2^T); W1/W2 are pre-split columns of
    # w_out (concat-free), pre-padded to D_pad so h is produced lane-dense.
    h = jnp.dot(wc.astype(w1t_ref.dtype), w1t_ref[...],
                preferred_element_type=jnp.float32)
    h = h + jnp.dot(inp.astype(w2t_ref.dtype), w2t_ref[...],
                    preferred_element_type=jnp.float32)  # (tb, D_pad) f32
    h_ref[...] = jnp.tanh(h).astype(h_ref.dtype)

    # Lane-dense stores for wc / attn (zero-pad the lane axis to the block width).
    wc_ref[...] = _pad_lanes(wc.astype(wc_ref.dtype), wc_ref.shape[-1])
    attn_ref[...] = _pad_lanes(attn.astype(attn_ref.dtype), attn_ref.shape[-1])


def _pick_vmem_limit():
    """~75% of physical VMEM: ~48 MiB on v7x (64 MiB parts), ~96 MiB on v5e/v6e
    (128 MiB parts); capped at 100 MiB."""
    cap = 64 * 1024 * 1024
    try:
        info = pltpu.get_tpu_info()
        cap = int(getattr(info, "vmem_capacity_bytes", cap) or cap)
    except Exception:
        pass
    return min(cap * 3 // 4, 100 * 1024 * 1024)


def _plan_tiles(B, L, D, L_pad, D_pad, ctx_items, out_items, vmem_limit):
    """Pick (TB, B_pad): TB a multiple of 8 dividing B_pad, sized so the full
    per-step working set fits inside vmem_limit with headroom."""
    # Fixed consumers: two (D, D_pad) projection weights + two (1, D) attention
    # weight slices, each double-buffered by the pipeline.
    fixed = 4 * D * D_pad * 4 + 4 * D * 4
    # Per batch-row consumers.
    per_row = (2 * L * D * ctx_items                    # ctx block   (x2 buffers)
               + 2 * D * ctx_items                      # inp block   (x2 buffers)
               + 2 * (2 * D_pad + L_pad) * out_items    # h/wc/attn   (x2 buffers)
               + 2 * L * D * max(ctx_items, 4)          # (L,D) product temporaries
               + (2 * L + L_pad + 3 * D_pad) * 4)       # softmax state, f32 rows
    budget = max(int(vmem_limit * 0.85) - fixed, 8 * per_row)
    max_tb = max(8, budget // per_row // 8 * 8)

    b8 = _round_up(B, 8)                    # batch padded to the sublane quantum
    cap = max(8, min(max_tb, 256, b8))      # 256 keeps per-step overhead tiny and
                                            # the MXU M-dim well fed
    tb = 8
    for cand in range(8, cap + 1, 8):       # largest multiple of 8 dividing b8
        if b8 % cand == 0:
            tb = cand
    if b8 // tb == 1 and b8 >= 16:          # prefer >=2 steps: double-buffering +
        for cand in range(8, b8 // 2 + 1, 8):   # megacore sharding on v7x
            if b8 % cand == 0 and cand <= cap:
                tb = cand
    return tb, b8


def linear_attention(inp, ctx, w_attn, w_out):
    """inp: (B, D), ctx: (B, L, D), w_attn: (1, 3D), w_out: (D, 2D).
    Returns (h_tilde (B, D), weighted_context (B, D), attn (B, L))."""
    B, D = inp.shape
    L = ctx.shape[1]
    L_pad = _round_up(L, 128)
    D_pad = _round_up(D, 128)

    # Split (1, 3D) attention weight [wu | wv | wuv]; wu cancels in the softmax.
    wv = w_attn[:, D:2 * D]                      # (1, D)
    wuv = w_attn[:, 2 * D:]                      # (1, D)
    # Pre-split + pre-transpose the output projection; pad its output columns to
    # D_pad so h is computed/stored lane-dense (padded columns are exactly zero).
    w1_t = w_out[:, :D].T                        # (D, D)  multiplies weighted_context
    w2_t = w_out[:, D:].T                        # (D, D)  multiplies input
    if D_pad != D:
        zcols = jnp.zeros((D, D_pad - D), dtype=w_out.dtype)
        w1_t = jnp.concatenate([w1_t, zcols], axis=1)
        w2_t = jnp.concatenate([w2_t, zcols], axis=1)

    ctx_items = jnp.dtype(ctx.dtype).itemsize
    out_items = jnp.dtype(inp.dtype).itemsize
    vmem_limit = _pick_vmem_limit()
    tb, B_pad = _plan_tiles(B, L, D, L_pad, D_pad, ctx_items, out_items, vmem_limit)

    if B_pad != B:
        # Only hit when B is not a multiple of 8; costs one extra HBM copy of ctx
        # but keeps every block (8,128)-aligned (padded rows are discarded below).
        inp_k = jnp.pad(inp, ((0, B_pad - B), (0, 0)))
        ctx_k = jnp.pad(ctx, ((0, B_pad - B), (0, 0), (0, 0)))
    else:
        inp_k, ctx_k = inp, ctx

    grid = (B_pad // tb,)
    out_shapes = (
        jax.ShapeDtypeStruct((B_pad, D_pad), inp.dtype),   # h_tilde (padded)
        jax.ShapeDtypeStruct((B_pad, D_pad), inp.dtype),   # weighted_context (padded)
        jax.ShapeDtypeStruct((B_pad, L_pad), inp.dtype),   # attn (padded)
    )
    in_specs = [
        pl.BlockSpec((tb, D), lambda i: (i, 0)),           # inp
        pl.BlockSpec((tb, L, D), lambda i: (i, 0, 0)),     # ctx
        pl.BlockSpec((1, D), lambda i: (0, 0)),            # wv   (untiled)
        pl.BlockSpec((1, D), lambda i: (0, 0)),            # wuv  (untiled)
        pl.BlockSpec((D, D_pad), lambda i: (0, 0)),        # w1_t (untiled)
        pl.BlockSpec((D, D_pad), lambda i: (0, 0)),        # w2_t (untiled)
    ]
    out_specs = (
        pl.BlockSpec((tb, D_pad), lambda i: (i, 0)),       # h_tilde
        pl.BlockSpec((tb, D_pad), lambda i: (i, 0)),       # weighted_context
        pl.BlockSpec((tb, L_pad), lambda i: (i, 0)),       # attn
    )

    cost = pl.CostEstimate(
        flops=4 * B_pad * L * D + 4 * B_pad * D * D_pad + 5 * B_pad * L,
        transcendentals=B_pad * (L + D_pad),
        bytes_accessed=(ctx_items * B_pad * (L * D + D)
                        + 4 * (2 * D + 2 * D * D_pad)
                        + out_items * B_pad * (2 * D_pad + L_pad)),
    )

    h_p, wc_p, attn_p = pl.pallas_call(
        linear_attention_kernel,
        out_shape=out_shapes,
        grid=grid,
        in_specs=in_specs,
        out_specs=out_specs,
        compiler_params=pltpu.CompilerParams(
            # no-op on single-TC v5e/v6e, shards the batch axis across v7x's 2 TCs
            dimension_semantics=("parallel",),
            vmem_limit_bytes=vmem_limit,
        ),
        cost_estimate=cost,
    )(inp_k, ctx_k, wv, wuv, w1_t, w2_t)

    # Slice back to the module's logical shapes.
    return h_p[:B, :D], wc_p[:B, :D], attn_p[:B, :L]


def linear_attention_ref(inp, ctx, w_attn, w_out):
    B, L, D = ctx.shape
    u = jnp.broadcast_to(inp[:, None, :], (B, L, D)).reshape(-1, D)
    v = ctx.reshape(-1, D)
    attn_in = jnp.concatenate([u, v, u * v], axis=1)
    attn = (attn_in @ w_attn.T).reshape(B, L)
    attn = jax.nn.softmax(attn, axis=1)
    wc = jnp.einsum('bl,bld->bd', attn, ctx)
    h = jnp.tanh(jnp.concatenate([wc, inp], axis=1) @ w_out.T)
    return h, wc, attn


if __name__ == "__main__":
    B, L, D = 2, 8, 32
    key = jax.random.PRNGKey(0)
    k1, k2, k3, k4 = jax.random.split(key, 4)

    inp = jax.random.normal(k1, (B, D), dtype=jnp.float32)
    ctx = jax.random.normal(k2, (B, L, D), dtype=jnp.float32)
    # nn.Linear(dim*3, 1, bias=False)  -> weight shape (1, 3D)
    w_attn = jax.random.normal(k3, (1, 3 * D), dtype=jnp.float32) * 0.1
    # nn.Linear(dim*2, dim, bias=False) -> weight shape (D, 2D)
    w_out = jax.random.normal(k4, (D, 2 * D), dtype=jnp.float32) * 0.1

    h_tilde, weighted_ctx, attn = linear_attention(inp, ctx, w_attn, w_out)
    jax.block_until_ready((h_tilde, weighted_ctx, attn))

    h_r, wc_r, attn_r = linear_attention_ref(inp, ctx, w_attn, w_out)
    assert h_tilde.shape == (B, D)
    assert weighted_ctx.shape == (B, D)
    assert attn.shape == (B, L)
    assert jnp.allclose(h_tilde, h_r, atol=1e-5, rtol=1e-5)
    assert jnp.allclose(weighted_ctx, wc_r, atol=1e-5, rtol=1e-5)
    assert jnp.allclose(attn, attn_r, atol=1e-5, rtol=1e-5)

    print("KERNEL_OK")
</pallas_src>

<mosaic_0001>
module attributes {stable_mosaic.version = 11 : i64} {
  func.func @linear_attention_kernel(%arg0: i32, %arg1: memref<8x32xf32, #tpu.memory_space<vmem>>, %arg2: memref<8x8x32xf32, #tpu.memory_space<vmem>>, %arg3: memref<1x32xf32, #tpu.memory_space<vmem>>, %arg4: memref<1x32xf32, #tpu.memory_space<vmem>>, %arg5: memref<32x128xf32, #tpu.memory_space<vmem>>, %arg6: memref<32x128xf32, #tpu.memory_space<vmem>>, %arg7: memref<8x128xf32, #tpu.memory_space<vmem>>, %arg8: memref<8x128xf32, #tpu.memory_space<vmem>>, %arg9: memref<8x128xf32, #tpu.memory_space<vmem>>) attributes {dimension_semantics = [#tpu.dimension_semantics<parallel>], iteration_bounds = array<i64: 1>, scalar_prefetch = 0 : i64, scratch_operands = 0 : i64, tpu.core_type = #tpu.core_type<tc>, window_params = [{transform_indices = @transform_0, window_bounds = array<i64: 8, 32>}, {transform_indices = @transform_1, window_bounds = array<i64: 8, 8, 32>}, {pipeline_mode = #tpu.pipeline_mode<synchronous>, transform_indices = @transform_2, window_bounds = array<i64: 1, 32>}, {pipeline_mode = #tpu.pipeline_mode<synchronous>, transform_indices = @transform_3, window_bounds = array<i64: 1, 32>}, {pipeline_mode = #tpu.pipeline_mode<synchronous>, transform_indices = @transform_4, window_bounds = array<i64: 32, 128>}, {pipeline_mode = #tpu.pipeline_mode<synchronous>, transform_indices = @transform_5, window_bounds = array<i64: 32, 128>}, {transform_indices = @transform_6, window_bounds = array<i64: 8, 128>}, {transform_indices = @transform_7, window_bounds = array<i64: 8, 128>}, {transform_indices = @transform_8, window_bounds = array<i64: 8, 128>}]} {
    %c0 = arith.constant 0 : index
    %c0_0 = arith.constant 0 : index
    %0 = vector.load %arg1[%c0, %c0_0] : memref<8x32xf32, #tpu.memory_space<vmem>>, vector<8x32xf32>
    %c0_1 = arith.constant 0 : index
    %c0_2 = arith.constant 0 : index
    %c0_3 = arith.constant 0 : index
    %1 = vector.load %arg2[%c0_1, %c0_2, %c0_3] : memref<8x8x32xf32, #tpu.memory_space<vmem>>, vector<8x8x32xf32>
    %c0_4 = arith.constant 0 : index
    %c0_5 = arith.constant 0 : index
    %2 = vector.load %arg3[%c0_4, %c0_5] : memref<1x32xf32, #tpu.memory_space<vmem>>, vector<1x32xf32>
    %c0_6 = arith.constant 0 : index
    %c0_7 = arith.constant 0 : index
    %3 = vector.load %arg4[%c0_6, %c0_7] : memref<1x32xf32, #tpu.memory_space<vmem>>, vector<1x32xf32>
    %4 = vector.broadcast %3 : vector<1x32xf32> to vector<8x32xf32>
    %5 = arith.mulf %0, %4 : vector<8x32xf32>
    %6 = vector.broadcast %2 : vector<1x32xf32> to vector<8x32xf32>
    %7 = arith.addf %6, %5 : vector<8x32xf32>
    %8 = vector.shape_cast %7 : vector<8x32xf32> to vector<8x1x32xf32>
    %9 = vector.broadcast %8 : vector<8x1x32xf32> to vector<8x8x32xf32>
    %10 = arith.mulf %1, %9 : vector<8x8x32xf32>
    %cst = arith.constant dense<0.000000e+00> : vector<8x8xf32>
    %11 = vector.multi_reduction <add>, %10, %cst [2] : vector<8x8x32xf32> to vector<8x8xf32>
    %cst_8 = arith.constant dense<0xFF800000> : vector<8xf32>
    %12 = vector.multi_reduction <maximumf>, %11, %cst_8 [1] : vector<8x8xf32> to vector<8xf32>
    %13 = vector.shape_cast %12 : vector<8xf32> to vector<8x1xf32>
    %14 = vector.broadcast %13 : vector<8x1xf32> to vector<8x8xf32>
    %15 = arith.subf %11, %14 : vector<8x8xf32>
    %16 = math.exp %15 : vector<8x8xf32>
    %cst_9 = arith.constant dense<0.000000e+00> : vector<8xf32>
    %17 = vector.multi_reduction <add>, %16, %cst_9 [1] : vector<8x8xf32> to vector<8xf32>
    %18 = vector.shape_cast %17 : vector<8xf32> to vector<8x1xf32>
    %19 = vector.broadcast %18 : vector<8x1xf32> to vector<8x8xf32>
    %20 = arith.divf %16, %19 : vector<8x8xf32>
    %21 = vector.shape_cast %20 : vector<8x8xf32> to vector<8x8x1xf32>
    %22 = vector.broadcast %21 : vector<8x8x1xf32> to vector<8x8x32xf32>
    %23 = arith.mulf %22, %1 : vector<8x8x32xf32>
    %cst_10 = arith.constant dense<0.000000e+00> : vector<8x32xf32>
    %24 = vector.multi_reduction <add>, %23, %cst_10 [1] : vector<8x8x32xf32> to vector<8x32xf32>
    %c0_11 = arith.constant 0 : index
    %c0_12 = arith.constant 0 : index
    %25 = vector.load %arg5[%c0_11, %c0_12] : memref<32x128xf32, #tpu.memory_space<vmem>>, vector<32x128xf32>
    %cst_13 = arith.constant dense<0.000000e+00> : vector<8x128xf32>
    %26 = tpu.matmul %24, %25, %cst_13 {dimension_numbers = #tpu.dot_dimension_numbers<[1], [0], [0], [1], [0, 0, 1, 1], [], []>} : vector<8x32xf32>, vector<32x128xf32>, vector<8x128xf32> -> vector<8x128xf32>
    %c0_14 = arith.constant 0 : index
    %c0_15 = arith.constant 0 : index
    %27 = vector.load %arg6[%c0_14, %c0_15] : memref<32x128xf32, #tpu.memory_space<vmem>>, vector<32x128xf32>
    %cst_16 = arith.constant dense<0.000000e+00> : vector<8x128xf32>
    %28 = tpu.matmul %0, %27, %cst_16 {dimension_numbers = #tpu.dot_dimension_numbers<[1], [0], [0], [1], [0, 0, 1, 1], [], []>} : vector<8x32xf32>, vector<32x128xf32>, vector<8x128xf32> -> vector<8x128xf32>
    %29 = arith.addf %26, %28 : vector<8x128xf32>
    %30 = math.tanh %29 : vector<8x128xf32>
    %c0_17 = arith.constant 0 : index
    %c0_18 = arith.constant 0 : index
    %31 = vector.load %arg7[%c0_17, %c0_18] : memref<8x128xf32, #tpu.memory_space<vmem>>, vector<8x128xf32>
    tpu.vector_store %arg7[%c0_17, %c0_18], %30 {strides = array<i32>} : memref<8x128xf32, #tpu.memory_space<vmem>>, vector<8x128xf32>,
    %cst_19 = arith.constant 0.000000e+00 : f32
    %32 = vector.broadcast %cst_19 : f32 to vector<8x96xf32>
    %33 = tpu.concatenate %24, %32 in 1 : vector<8x32xf32>, vector<8x96xf32> -> vector<8x128xf32>
    %c0_20 = arith.constant 0 : index
    %c0_21 = arith.constant 0 : index
    %34 = vector.load %arg8[%c0_20, %c0_21] : memref<8x128xf32, #tpu.memory_space<vmem>>, vector<8x128xf32>
    tpu.vector_store %arg8[%c0_20, %c0_21], %33 {strides = array<i32>} : memref<8x128xf32, #tpu.memory_space<vmem>>, vector<8x128xf32>,
    %cst_22 = arith.constant 0.000000e+00 : f32
    %35 = vector.broadcast %cst_22 : f32 to vector<8x120xf32>
    %36 = tpu.concatenate %20, %35 in 1 : vector<8x8xf32>, vector<8x120xf32> -> vector<8x128xf32>
    %c0_23 = arith.constant 0 : index
    %c0_24 = arith.constant 0 : index
    %37 = vector.load %arg9[%c0_23, %c0_24] : memref<8x128xf32, #tpu.memory_space<vmem>>, vector<8x128xf32>
    tpu.vector_store %arg9[%c0_23, %c0_24], %36 {strides = array<i32>} : memref<8x128xf32, #tpu.memory_space<vmem>>, vector<8x128xf32>,
    return
  }
  func.func @transform_0(%arg0: i32) -> (i32, i32) {
    %c0_i32 = arith.constant 0 : i32
    %c0_i32_0 = arith.constant 0 : i32
    return %arg0, %c0_i32 : i32, i32
  }
  func.func @transform_1(%arg0: i32) -> (i32, i32, i32) {
    %c0_i32 = arith.constant 0 : i32
    %c0_i32_0 = arith.constant 0 : i32
    %c0_i32_1 = arith.constant 0 : i32
    return %arg0, %c0_i32, %c0_i32_0 : i32, i32, i32
  }
  func.func @transform_2(%arg0: i32) -> (i32, i32) {
    %c0_i32 = arith.constant 0 : i32
    %c0_i32_0 = arith.constant 0 : i32
    %c0_i32_1 = arith.constant 0 : i32
    return %c0_i32, %c0_i32_0 : i32, i32
  }
  func.func @transform_3(%arg0: i32) -> (i32, i32) {
    %c0_i32 = arith.constant 0 : i32
    %c0_i32_0 = arith.constant 0 : i32
    %c0_i32_1 = arith.constant 0 : i32
    return %c0_i32, %c0_i32_0 : i32, i32
  }
  func.func @transform_4(%arg0: i32) -> (i32, i32) {
    %c0_i32 = arith.constant 0 : i32
    %c0_i32_0 = arith.constant 0 : i32
    %c0_i32_1 = arith.constant 0 : i32
    return %c0_i32, %c0_i32_0 : i32, i32
  }
  func.func @transform_5(%arg0: i32) -> (i32, i32) {
    %c0_i32 = arith.constant 0 : i32
    %c0_i32_0 = arith.constant 0 : i32
    %c0_i32_1 = arith.constant 0 : i32
    return %c0_i32, %c0_i32_0 : i32, i32
  }
  func.func @transform_6(%arg0: i32) -> (i32, i32) {
    %c0_i32 = arith.constant 0 : i32
    %c0_i32_0 = arith.constant 0 : i32
    return %arg0, %c0_i32 : i32, i32
  }
  func.func @transform_7(%arg0: i32) -> (i32, i32) {
    %c0_i32 = arith.constant 0 : i32
    %c0_i32_0 = arith.constant 0 : i32
    return %arg0, %c0_i32 : i32, i32
  }
  func.func @transform_8(%arg0: i32) -> (i32, i32) {
    %c0_i32 = arith.constant 0 : i32
    %c0_i32_0 = arith.constant 0 : i32
    return %arg0, %c0_i32 : i32, i32
  }
}

</mosaic_0001>

<llo_original>
// kernel: tpu_custom_call.1
$region0: #{tpu_custom_call.1}
  #allocation0 [shape = 'u32[]', space=smem, size = 0x4, offset = 0x4, fixed_abs, tag = 'smem constant byte address 0x4 - core index']
  #allocation1 [shape = 'u32[144,128]{1,0:T(1,128)}', space=vmem, size = 0x12000, scoped, tag = 'internal scratch']
  %s0 = inlined_call_operand.hbm [shape: f32[8,32], index: 0, kind: input, shape index: {}]
  %s1 = inlined_call_operand.hbm [shape: f32[8,8,32], index: 1, kind: input, shape index: {}]
  %s2 = inlined_call_operand.vmem [shape: f32[1,32], index: 2, kind: input, shape index: {}]
  %s3 = inlined_call_operand.vmem [shape: f32[1,32], index: 3, kind: input, shape index: {}]
  %s4 = inlined_call_operand.hbm [shape: f32[32,128], index: 4, kind: input, shape index: {}]
  %s5 = inlined_call_operand.hbm [shape: f32[32,128], index: 5, kind: input, shape index: {}]
  %s6 = inlined_call_operand.hbm [shape: f32[8,128], index: 6, kind: output, shape index: {0}]
  %s7 = inlined_call_operand.hbm [shape: f32[8,128], index: 7, kind: output, shape index: {1}]
  %s8 = inlined_call_operand.hbm [shape: f32[8,128], index: 8, kind: output, shape index: {2}]
  %9 = xla_tuple %s6, %s7, %s8
  %s10 = sld [smem:[#allocation0]]
  $region66: #{tpu_custom_call.1} parent=0
    _
  %s12 = ssub.s32 1, %s10
  %s13 = scalar_select 0, %s12, %s10
  $region1: #{tpu_custom_call.1} parent=0
    #allocation2 [shape = 'u8[4096]{0}', space=vmem, size = 0x1000, scoped, tag = 'input window, operand 0, single buffered']
    #allocation3 [shape = 's32[1]{0}', space=sflag, size = 0x4, scoped, tag = 'scoped memory for tpu_custom_call.1']
    #allocation4 [shape = 's32[1]{0}', space=sflag, size = 0x4, scoped, tag = 'scoped memory for tpu_custom_call.1']
    #allocation5 [shape = 'u8[32768]{0}', space=vmem, size = 0x8000, scoped, tag = 'input window, operand 1, single buffered']
    #allocation6 [shape = 's32[1]{0}', space=sflag, size = 0x4, scoped, tag = 'scoped memory for tpu_custom_call.1']
    #allocation7 [shape = 'u8[16384]{0}', space=vmem, size = 0x4000, scoped, tag = 'input window, operand 4, single buffered']
    #allocation8 [shape = 'u8[16384]{0}', space=vmem, size = 0x4000, scoped, tag = 'input window, operand 5, single buffered']
    #allocation9 [shape = 's32[1]{0}', space=sflag, size = 0x4, scoped, tag = 'scoped memory for tpu_custom_call.1']
    #allocation10 [shape = 'u8[4096]{0}', space=vmem, size = 0x1000, scoped, tag = 'output window, operand 0, single buffered']
    #allocation11 [shape = 'u8[4096]{0}', space=vmem, size = 0x1000, scoped, tag = 'output window, operand 1, single buffered']
    #allocation12 [shape = 's32[1]{0}', space=sflag, size = 0x4, scoped, tag = 'scoped memory for tpu_custom_call.1']
    #allocation13 [shape = 'u8[4096]{0}', space=vmem, size = 0x1000, scoped, tag = 'output window, operand 2, single buffered']
    %14 = vsyncpa [#allocation3], 0
    %15 = vsyncpa [#allocation6], 0
    %16 = vsyncpa [#allocation9], 0
    %17 = vsyncpa [#allocation4], 0
    %18 = vsyncpa [#allocation12], 0
    // Predicated region
    $region2: #{tpu_custom_call.1} parent=1 // pred_check
      _
    $region3: #{tpu_custom_call.1} parent=1 // pred_check_branch
      %20 = sbr.rel (0) target = $region5
    $region4: #{tpu_custom_call.1} parent=1 // pred_region
      %s22 = ssub.s32 128, 128
      %23 = vsyncadd [#allocation3], %s22
      %s25 = sshll.u32 [#allocation2], 4
      %s26 = int_to_ptr.vmem [resolvable:$true] %s25
      %28 = dma.hbm_to_vmem [thread:$0]  %s0, 128, %s26, [#allocation3]
    $region5: #{tpu_custom_call.1} parent=1 // pred_fallthru
      _
    // Predicated region
    $region6: #{tpu_custom_call.1} parent=1 // pred_check
      _
    $region7: #{tpu_custom_call.1} parent=1 // pred_check_branch
      %30 = sbr.rel (0) target = $region9
    $region8: #{tpu_custom_call.1} parent=1 // pred_region
      %s32 = ssub.s32 1024, 1024
      %33 = vsyncadd [#allocation6], %s32
      %s34 = sshll.u32 [#allocation5], 4
      %s35 = int_to_ptr.vmem [resolvable:$true] %s34
      %40 = dma.hbm_to_vmem [thread:$0]  %s1, 1024, %s35, [#allocation6], 128, 128, 8
    $region9: #{tpu_custom_call.1} parent=1 // pred_fallthru
      _
    // Predicated region
    $region10: #{tpu_custom_call.1} parent=1 // pred_check
      _
    $region11: #{tpu_custom_call.1} parent=1 // pred_check_branch
      %42 = sbr.rel (0) target = $region13
    $region12: #{tpu_custom_call.1} parent=1 // pred_region
      _
    $region13: #{tpu_custom_call.1} parent=1 // pred_fallthru
      _
    // Predicated region
    $region14: #{tpu_custom_call.1} parent=1 // pred_check
      _
    $region15: #{tpu_custom_call.1} parent=1 // pred_check_branch
      %44 = sbr.rel (0) target = $region17
    $region16: #{tpu_custom_call.1} parent=1 // pred_region
      _
    $region17: #{tpu_custom_call.1} parent=1 // pred_fallthru
      _
    // Predicated region
    $region18: #{tpu_custom_call.1} parent=1 // pred_check
      _
    $region19: #{tpu_custom_call.1} parent=1 // pred_check_branch
      %46 = sbr.rel (0) target = $region21
    $region20: #{tpu_custom_call.1} parent=1 // pred_region
      %s48 = ssub.s32 512, 512
      %49 = vsyncadd [#allocation6], %s48
      %s50 = sshll.u32 [#allocation7], 4
      %s51 = int_to_ptr.vmem [resolvable:$true] %s50
      %56 = dma.hbm_to_vmem [thread:$0]  %s4, 512, %s51, [#allocation6], 128, 128, 8
    $region21: #{tpu_custom_call.1} parent=1 // pred_fallthru
      _
    // Predicated region
    $region22: #{tpu_custom_call.1} parent=1 // pred_check
      _
    $region23: #{tpu_custom_call.1} parent=1 // pred_check_branch
      %58 = sbr.rel (0) target = $region25
    $region24: #{tpu_custom_call.1} parent=1 // pred_region
      %s60 = ssub.s32 512, 512
      %61 = vsyncadd [#allocation9], %s60
      %s62 = sshll.u32 [#allocation8], 4
      %s63 = int_to_ptr.vmem [resolvable:$true] %s62
      %68 = dma.hbm_to_vmem [thread:$0]  %s5, 512, %s63, [#allocation9], 128, 128, 8
    $region25: #{tpu_custom_call.1} parent=1 // pred_fallthru
      _
    // Predicated region
    $region26: #{tpu_custom_call.1} parent=1 // pred_check
      _
    $region27: #{tpu_custom_call.1} parent=1 // pred_check_branch
      %70 = sbr.rel (0) target = $region29
    $region28: #{tpu_custom_call.1} parent=1 // pred_region
      %71 = dma.done [#allocation3], 128
    $region29: #{tpu_custom_call.1} parent=1 // pred_fallthru
      _
    // Predicated region
    $region30: #{tpu_custom_call.1} parent=1 // pred_check
      _
    $region31: #{tpu_custom_call.1} parent=1 // pred_check_branch
      %73 = sbr.rel (0) target = $region33
    $region32: #{tpu_custom_call.1} parent=1 // pred_region
      %74 = dma.done [#allocation6], 1024
    $region33: #{tpu_custom_call.1} parent=1 // pred_fallthru
      _
    // Predicated region
    $region34: #{tpu_custom_call.1} parent=1 // pred_check
      _
    $region35: #{tpu_custom_call.1} parent=1 // pred_check_branch
      %76 = sbr.rel (0) target = $region37
    $region36: #{tpu_custom_call.1} parent=1 // pred_region
      %77 = dma.done [#allocation6], 512
    $region37: #{tpu_custom_call.1} parent=1 // pred_fallthru
      _
    // Predicated region
    $region38: #{tpu_custom_call.1} parent=1 // pred_check
      _
    $region39: #{tpu_custom_call.1} parent=1 // pred_check_branch
      %79 = sbr.rel (0) target = $region41
    $region40: #{tpu_custom_call.1} parent=1 // pred_region
      %80 = dma.done [#allocation9], 512
    $region41: #{tpu_custom_call.1} parent=1 // pred_fallthru
      _
    %v81 = vld [vmem:[#allocation2] sm:$0xff]
    %v82 = vld [vmem:[#allocation5] sm:$0xff]
    %v83 = vld [vmem:[#allocation5 + $0x8] sm:$0xff]
    %v84 = vld [vmem:[#allocation5 + $0x10] sm:$0xff]
    %v85 = vld [vmem:[#allocation5 + $0x18] sm:$0xff]
    %v86 = vld [vmem:[#allocation5 + $0x20] sm:$0xff]
    %v87 = vld [vmem:[#allocation5 + $0x28] sm:$0xff]
    %v88 = vld [vmem:[#allocation5 + $0x30] sm:$0xff]
    %v89 = vld [vmem:[#allocation5 + $0x38] sm:$0xff]
    %v90 = vld [vmem:[%s2] sm:$0x1]
    %v91 = vld [vmem:[%s3] sm:$0x1]
    %v93 = vlaneseq
    %v94 = vshrl.u32 %v93, 7
    %v95 = vsub.s32 0, %v94
    %v96 = vrot.slane %v91, %v95
    %v98 = vmul.f32 %v81, %v96
    %v100 = vlaneseq
    %v101 = vshrl.u32 %v100, 7
    %v102 = vsub.s32 0, %v101
    %v103 = vrot.slane %v90, %v102
    %v105 = vadd.f32 %v103, %v98
    %v107 = vcombine.high %v105, %v105
    %v109 = vunpack.c.l.s4 1966171168
    %v110 = vunpack.c.0.s8 %v109
    %v111 = vlaneseq
    %v112 = vshrl.u32 %v111, 7
    %v113 = vsub.s32 %v110, %v112
    %v114 = vrot.slane %v105, %v113
    %v116 = vunpack.c.l.s4 1966171168
    %v117 = vunpack.c.0.s8 %v116
    %v118 = vlaneseq
    %v119 = vshrl.u32 %v118, 7
    %v120 = vsub.s32 %v117, %v119
    %v121 = vrot.slane %v107, %v120
    %v122 = vcombine.high %v114, %v114
    %v123 = vcombine.high %v121, %v121
    %v125 = vunpack.c.l.s4 1966171168
    %v126 = vunpack.c.0.s8 %v125
    %v127 = vlaneseq
    %v128 = vshrl.u32 %v127, 7
    %v129 = vsub.s32 %v126, %v128
    %v130 = vrot.slane %v114, %v129
    %v132 = vunpack.c.l.s4 1966171168
    %v133 = vunpack.c.0.s8 %v132
    %v134 = vlaneseq
    %v135 = vshrl.u32 %v134, 7
    %v136 = vsub.s32 %v133, %v135
    %v137 = vrot.slane %v121, %v136
    %v139 = vunpack.c.l.s4 1966171168
    %v140 = vunpack.c.0.s8 %v139
    %v141 = vlaneseq
    %v142 = vshrl.u32 %v141, 7
    %v143 = vsub.s32 %v140, %v142
    %v144 = vrot.slane %v122, %v143
    %v146 = vunpack.c.l.s4 1966171168
    %v147 = vunpack.c.0.s8 %v146
    %v148 = vlaneseq
    %v149 = vshrl.u32 %v148, 7
    %v150 = vsub.s32 %v147, %v149
    %v151 = vrot.slane %v123, %v150
    %v152 = vcombine.high %v130, %v130
    %v153 = vcombine.high %v137, %v137
    %v154 = vcombine.high %v144, %v144
    %v155 = vcombine.high %v151, %v151
    %v156 = vlaneseq
    %v157 = vshrl.u32 %v156, 7
    %v158 = vsub.s32 0, %v157
    %v159 = vrot.slane %v130, %v158
    %v160 = vlaneseq
    %v161 = vshrl.u32 %v160, 7
    %v162 = vsub.s32 0, %v161
    %v163 = vrot.slane %v144, %v162
    %v164 = vlaneseq
    %v165 = vshrl.u32 %v164, 7
    %v166 = vsub.s32 0, %v165
    %v167 = vrot.slane %v152, %v166
    %v168 = vlaneseq
    %v169 = vshrl.u32 %v168, 7
    %v170 = vsub.s32 0, %v169
    %v171 = vrot.slane %v154, %v170
    %v172 = vlaneseq
    %v173 = vshrl.u32 %v172, 7
    %v174 = vsub.s32 0, %v173
    %v175 = vrot.slane %v137, %v174
    %v176 = vlaneseq
    %v177 = vshrl.u32 %v176, 7
    %v178 = vsub.s32 0, %v177
    %v179 = vrot.slane %v151, %v178
    %v180 = vlaneseq
    %v181 = vshrl.u32 %v180, 7
    %v182 = vsub.s32 0, %v181
    %v183 = vrot.slane %v153, %v182
    %v184 = vlaneseq
    %v185 = vshrl.u32 %v184, 7
    %v186 = vsub.s32 0, %v185
    %v187 = vrot.slane %v155, %v186
    %v196 = vmul.f32 %v82, %v159
    %v197 = vmul.f32 %v83, %v163
    %v198 = vmul.f32 %v84, %v167
    %v199 = vmul.f32 %v85, %v171
    %v200 = vmul.f32 %v86, %v175
    %v201 = vmul.f32 %v87, %v179
    %v202 = vmul.f32 %v88, %v183
    %v203 = vmul.f32 %v89, %v187
    %vm204 = vcmask 261120
    %v205 = vsel %vm204, %v196, 0.0
    %206 = vadd.xlane.f32.xlu0 %v205
    %v207 = vpop.xlane.xlu0 %206
    %v208 = vsel %vm204, %v197, 0.0
    %209 = vadd.xlane.f32.xlu0 %v208
    %v210 = vpop.xlane.xlu0 %209
    %v211 = vsel %vm204, %v198, 0.0
    %212 = vadd.xlane.f32.xlu0 %v211
    %v213 = vpop.xlane.xlu0 %212
    %v214 = vsel %vm204, %v199, 0.0
    %215 = vadd.xlane.f32.xlu0 %v214
    %v216 = vpop.xlane.xlu0 %215
    %v217 = vsel %vm204, %v200, 0.0
    %218 = vadd.xlane.f32.xlu0 %v217
    %v219 = vpop.xlane.xlu0 %218
    %v220 = vsel %vm204, %v201, 0.0
    %221 = vadd.xlane.f32.xlu0 %v220
    %v222 = vpop.xlane.xlu0 %221
    %v223 = vsel %vm204, %v202, 0.0
    %224 = vadd.xlane.f32.xlu0 %v223
    %v225 = vpop.xlane.xlu0 %224
    %v226 = vsel %vm204, %v203, 0.0
    %227 = vadd.xlane.f32.xlu0 %v226
    %v228 = vpop.xlane.xlu0 %227
    %v237 = vlaneseq
    %v238 = vand.u32 %v237, 127
    %v239 = vlaneseq
    %v240 = vshrl.u32 %v239, 7
    %v241 = vsub.s32 %v238, %v240
    %v242 = vrot.slane %v207, %v241
    %v243 = vlaneseq
    %v244 = vshrl.u32 %v243, 7
    %v245 = vsub.s32 %v238, %v244
    %v246 = vrot.slane %v210, %v245
    %v247 = vlaneseq
    %v248 = vshrl.u32 %v247, 7
    %v249 = vsub.s32 %v238, %v248
    %v250 = vrot.slane %v213, %v249
    %v251 = vlaneseq
    %v252 = vshrl.u32 %v251, 7
    %v253 = vsub.s32 %v238, %v252
    %v254 = vrot.slane %v216, %v253
    %v255 = vlaneseq
    %v256 = vshrl.u32 %v255, 7
    %v257 = vsub.s32 %v238, %v256
    %v258 = vrot.slane %v219, %v257
    %v259 = vlaneseq
    %v260 = vshrl.u32 %v259, 7
    %v261 = vsub.s32 %v238, %v260
    %v262 = vrot.slane %v222, %v261
    %v263 = vlaneseq
    %v264 = vshrl.u32 %v263, 7
    %v265 = vsub.s32 %v238, %v264
    %v266 = vrot.slane %v225, %v265
    %v267 = vlaneseq
    %v268 = vshrl.u32 %v267, 7
    %v269 = vsub.s32 %v238, %v268
    %v270 = vrot.slane %v228, %v269
    %vm271 = vcmask 1041409
    %v272 = vsel %vm271, %v246, %v242
    %vm273 = vcmask 1042434
    %v274 = vsel %vm273, %v250, %v272
    %vm275 = vcmask 1043459
    %v276 = vsel %vm275, %v254, %v274
    %vm277 = vcmask 1044484
    %v278 = vsel %vm277, %v258, %v276
    %vm279 = vcmask 1045509
    %v280 = vsel %vm279, %v262, %v278
    %vm281 = vcmask 1046534
    %v282 = vsel %vm281, %v266, %v280
    %vm283 = vcmask 1047559
    %v284 = vsel %vm283, %v270, %v282
    %vm286 = vcmask 64512
    %v287 = vsel %vm286, %v284, -inf
    %288 = vmax.xlane.f32.xlu0 %v287
    %v289 = vpop.xlane.xlu0 %288
    %v291 = vlaneseq
    %v292 = vshrl.u32 %v291, 7
    %v293 = vsub.s32 0, %v292
    %v294 = vrot.slane %v289, %v293
    %v295 = vlaneseq
    %v296 = vshrl.u32 %v295, 7
    %v297 = vsub.s32 1, %v296
    %v298 = vrot.slane %v289, %v297
    %v299 = vlaneseq
    %v300 = vshrl.u32 %v299, 7
    %v301 = vsub.s32 2, %v300
    %v302 = vrot.slane %v289, %v301
    %v303 = vlaneseq
    %v304 = vshrl.u32 %v303, 7
    %v305 = vsub.s32 3, %v304
    %v306 = vrot.slane %v289, %v305
    %v307 = vlaneseq
    %v308 = vshrl.u32 %v307, 7
    %v309 = vsub.s32 4, %v308
    %v310 = vrot.slane %v289, %v309
    %v311 = vlaneseq
    %v312 = vshrl.u32 %v311, 7
    %v313 = vsub.s32 5, %v312
    %v314 = vrot.slane %v289, %v313
    %v315 = vlaneseq
    %v316 = vshrl.u32 %v315, 7
    %v317 = vsub.s32 6, %v316
    %v318 = vrot.slane %v289, %v317
    %v319 = vlaneseq
    %v320 = vshrl.u32 %v319, 7
    %v321 = vsub.s32 7, %v320
    %v322 = vrot.slane %v289, %v321
    %v331 = vsub.f32 %v207, %v294
    %v332 = vsub.f32 %v210, %v298
    %v333 = vsub.f32 %v213, %v302
    %v334 = vsub.f32 %v216, %v306
    %v335 = vsub.f32 %v219, %v310
    %v336 = vsub.f32 %v222, %v314
    %v337 = vsub.f32 %v225, %v318
    %v338 = vsub.f32 %v228, %v322
    %v339 = vmul.f32 %v331, 1.442695
    %v340 = vpow.pop %v339
    %v341 = vmul.f32 %v332, 1.442695
    %v342 = vpow.pop %v341
    %v343 = vmul.f32 %v333, 1.442695
    %v344 = vpow.pop %v343
    %v345 = vmul.f32 %v334, 1.442695
    %v346 = vpow.pop %v345
    %v347 = vmul.f32 %v335, 1.442695
    %v348 = vpow.pop %v347
    %v349 = vmul.f32 %v336, 1.442695
    %v350 = vpow.pop %v349
    %v351 = vmul.f32 %v337, 1.442695
    %v352 = vpow.pop %v351
    %v353 = vmul.f32 %v338, 1.442695
    %v354 = vpow.pop %v353
    %363 = vset.pattern.permute.xlu0 0
    %364 = vperm.xlu0 %363, %v340
    %v365 = vpop.permute.xlu0 %364
    %366 = vset.pattern.permute.xlu0 0
    %367 = vperm.xlu0 %366, %v342
    %v368 = vpop.permute.xlu0 %367
    %369 = vset.pattern.permute.xlu0 0
    %370 = vperm.xlu0 %369, %v344
    %v371 = vpop.permute.xlu0 %370
    %372 = vset.pattern.permute.xlu0 0
    %373 = vperm.xlu0 %372, %v346
    %v374 = vpop.permute.xlu0 %373
    %375 = vset.pattern.permute.xlu0 0
    %376 = vperm.xlu0 %375, %v348
    %v377 = vpop.permute.xlu0 %376
    %378 = vset.pattern.permute.xlu0 0
    %379 = vperm.xlu0 %378, %v350
    %v380 = vpop.permute.xlu0 %379
    %381 = vset.pattern.permute.xlu0 0
    %382 = vperm.xlu0 %381, %v352
    %v383 = vpop.permute.xlu0 %382
    %384 = vset.pattern.permute.xlu0 0
    %385 = vperm.xlu0 %384, %v354
    %v386 = vpop.permute.xlu0 %385
    %v387 = vlaneseq
    %v388 = vshrl.u32 %v387, 7
    %v389 = vsub.s32 %v238, %v388
    %v390 = vrot.slane %v365, %v389
    %v391 = vlaneseq
    %v392 = vshrl.u32 %v391, 7
    %v393 = vsub.s32 %v238, %v392
    %v394 = vrot.slane %v368, %v393
    %v395 = vlaneseq
    %v396 = vshrl.u32 %v395, 7
    %v397 = vsub.s32 %v238, %v396
    %v398 = vrot.slane %v371, %v397
    %v399 = vlaneseq
    %v400 = vshrl.u32 %v399, 7
    %v401 = vsub.s32 %v238, %v400
    %v402 = vrot.slane %v374, %v401
    %v403 = vlaneseq
    %v404 = vshrl.u32 %v403, 7
    %v405 = vsub.s32 %v238, %v404
    %v406 = vrot.slane %v377, %v405
    %v407 = vlaneseq
    %v408 = vshrl.u32 %v407, 7
    %v409 = vsub.s32 %v238, %v408
    %v410 = vrot.slane %v380, %v409
    %v411 = vlaneseq
    %v412 = vshrl.u32 %v411, 7
    %v413 = vsub.s32 %v238, %v412
    %v414 = vrot.slane %v383, %v413
    %v415 = vlaneseq
    %v416 = vshrl.u32 %v415, 7
    %v417 = vsub.s32 %v238, %v416
    %v418 = vrot.slane %v386, %v417
    %v419 = vsel %vm271, %v394, %v390
    %v420 = vsel %vm273, %v398, %v419
    %v421 = vsel %vm275, %v402, %v420
    %v422 = vsel %vm277, %v406, %v421
    %v423 = vsel %vm279, %v410, %v422
    %v424 = vsel %vm281, %v414, %v423
    %v425 = vsel %vm283, %v418, %v424
    %v427 = vsel %vm286, %v425, 0.0
    %428 = vadd.xlane.f32.xlu0 %v427
    %v429 = vpop.xlane.xlu0 %428
    %v431 = vlaneseq
    %v432 = vshrl.u32 %v431, 7
    %v433 = vsub.s32 0, %v432
    %v434 = vrot.slane %v429, %v433
    %v435 = vlaneseq
    %v436 = vshrl.u32 %v435, 7
    %v437 = vsub.s32 1, %v436
    %v438 = vrot.slane %v429, %v437
    %v439 = vlaneseq
    %v440 = vshrl.u32 %v439, 7
    %v441 = vsub.s32 2, %v440
    %v442 = vrot.slane %v429, %v441
    %v443 = vlaneseq
    %v444 = vshrl.u32 %v443, 7
    %v445 = vsub.s32 3, %v444
    %v446 = vrot.slane %v429, %v445
    %v447 = vlaneseq
    %v448 = vshrl.u32 %v447, 7
    %v449 = vsub.s32 4, %v448
    %v450 = vrot.slane %v429, %v449
    %v451 = vlaneseq
    %v452 = vshrl.u32 %v451, 7
    %v453 = vsub.s32 5, %v452
    %v454 = vrot.slane %v429, %v453
    %v455 = vlaneseq
    %v456 = vshrl.u32 %v455, 7
    %v457 = vsub.s32 6, %v456
    %v458 = vrot.slane %v429, %v457
    %v459 = vlaneseq
    %v460 = vshrl.u32 %v459, 7
    %v461 = vsub.s32 7, %v460
    %v462 = vrot.slane %v429, %v461
    %v471 = vrcp.pop %v434
    %v472 = vmul.f32 %v340, %v471
    %v473 = vrcp.pop %v438
    %v474 = vmul.f32 %v342, %v473
    %v475 = vrcp.pop %v442
    %v476 = vmul.f32 %v344, %v475
    %v477 = vrcp.pop %v446
    %v478 = vmul.f32 %v346, %v477
    %v479 = vrcp.pop %v450
    %v480 = vmul.f32 %v348, %v479
    %v481 = vrcp.pop %v454
    %v482 = vmul.f32 %v350, %v481
    %v483 = vrcp.pop %v458
    %v484 = vmul.f32 %v352, %v483
    %v485 = vrcp.pop %v462
    %v486 = vmul.f32 %v354, %v485
    %488 = vset.pattern.permute.xlu0 0
    %489 = vperm.xlu0 %488, %v472
    %v490 = vpop.permute.xlu0 %489
    %493 = vset.pattern.permute.xlu0 0
    %494 = vperm.xlu0 %493, %v474
    %v495 = vpop.permute.xlu0 %494
    %498 = vset.pattern.permute.xlu0 0
    %499 = vperm.xlu0 %498, %v476
    %v500 = vpop.permute.xlu0 %499
    %503 = vset.pattern.permute.xlu0 0
    %504 = vperm.xlu0 %503, %v478
    %v505 = vpop.permute.xlu0 %504
    %508 = vset.pattern.permute.xlu0 0
    %509 = vperm.xlu0 %508, %v480
    %v510 = vpop.permute.xlu0 %509
    %513 = vset.pattern.permute.xlu0 0
    %514 = vperm.xlu0 %513, %v482
    %v515 = vpop.permute.xlu0 %514
    %518 = vset.pattern.permute.xlu0 0
    %519 = vperm.xlu0 %518, %v484
    %v520 = vpop.permute.xlu0 %519
    %523 = vset.pattern.permute.xlu0 0
    %524 = vperm.xlu0 %523, %v486
    %v525 = vpop.permute.xlu0 %524
    %v527 = vmul.f32 %v490, %v82
    %v528 = vmul.f32 %v495, %v83
    %v529 = vmul.f32 %v500, %v84
    %v530 = vmul.f32 %v505, %v85
    %v531 = vmul.f32 %v510, %v86
    %v532 = vmul.f32 %v515, %v87
    %v533 = vmul.f32 %v520, %v88
    %v534 = vmul.f32 %v525, %v89
    %v535 = vsel %vm204, %v527, 0.0
    %v536 = vrot.slane %v535, 4
    %v537 = vadd.f32 %v535, %v536
    %v538 = vrot.slane %v537, 2
    %v539 = vadd.f32 %v537, %v538
    %v540 = vrot.slane %v539, 1
    %v541 = vadd.f32 %v539, %v540
    %v542 = vsel %vm204, %v528, 0.0
    %v543 = vrot.slane %v542, 4
    %v544 = vadd.f32 %v542, %v543
    %v545 = vrot.slane %v544, 2
    %v546 = vadd.f32 %v544, %v545
    %v547 = vrot.slane %v546, 1
    %v548 = vadd.f32 %v546, %v547
    %v549 = vsel %vm204, %v529, 0.0
    %v550 = vrot.slane %v549, 4
    %v551 = vadd.f32 %v549, %v550
    %v552 = vrot.slane %v551, 2
    %v553 = vadd.f32 %v551, %v552
    %v554 = vrot.slane %v553, 1
    %v555 = vadd.f32 %v553, %v554
    %v556 = vsel %vm204, %v530, 0.0
    %v557 = vrot.slane %v556, 4
    %v558 = vadd.f32 %v556, %v557
    %v559 = vrot.slane %v558, 2
    %v560 = vadd.f32 %v558, %v559
    %v561 = vrot.slane %v560, 1
    %v562 = vadd.f32 %v560, %v561
    %v563 = vsel %vm204, %v531, 0.0
    %v564 = vrot.slane %v563, 4
    %v565 = vadd.f32 %v563, %v564
    %v566 = vrot.slane %v565, 2
    %v567 = vadd.f32 %v565, %v566
    %v568 = vrot.slane %v567, 1
    %v569 = vadd.f32 %v567, %v568
    %v570 = vsel %vm204, %v532, 0.0
    %v571 = vrot.slane %v570, 4
    %v572 = vadd.f32 %v570, %v571
    %v573 = vrot.slane %v572, 2
    %v574 = vadd.f32 %v572, %v573
    %v575 = vrot.slane %v574, 1
    %v576 = vadd.f32 %v574, %v575
    %v577 = vsel %vm204, %v533, 0.0
    %v578 = vrot.slane %v577, 4
    %v579 = vadd.f32 %v577, %v578
    %v580 = vrot.slane %v579, 2
    %v581 = vadd.f32 %v579, %v580
    %v582 = vrot.slane %v581, 1
    %v583 = vadd.f32 %v581, %v582
    %v584 = vsel %vm204, %v534, 0.0
    %v585 = vrot.slane %v584, 4
    %v586 = vadd.f32 %v584, %v585
    %v587 = vrot.slane %v586, 2
    %v588 = vadd.f32 %v586, %v587
    %v589 = vrot.slane %v588, 1
    %v590 = vadd.f32 %v588, %v589
    %v591 = vld [vmem:[#allocation7] sm:$0xff]
    %v592 = vld [vmem:[#allocation7 + $0x8] sm:$0xff]
    %v593 = vld [vmem:[#allocation7 + $0x10] sm:$0xff]
    %v594 = vld [vmem:[#allocation7 + $0x18] sm:$0xff]
    %v595 = vld [vmem:[#allocation8] sm:$0xff]
    %v596 = vld [vmem:[#allocation8 + $0x8] sm:$0xff]
    %v597 = vld [vmem:[#allocation8 + $0x10] sm:$0xff]
    %v598 = vld [vmem:[#allocation8 + $0x18] sm:$0xff]
    %v600 = vsel %vm204, %v81, 0
    %602 = vmatprep.subr.mxu0 0.0
    %603 = vmatpush1.msra.mxu0 %v595
    %604 = vmatprep.subr.mxu0 0.0
    %605 = vmatpush1.msra.mxu0 %v596
    %606 = vmatprep.subr.mxu0 0.0
    %607 = vmatpush1.msra.mxu0 %v597
    %608 = vmatprep.subr.mxu0 0.0
    %609 = vmatpush1.msra.mxu0 %v598
    %610 = vmatprep.subr.mxu0 0.0
    %611 = vmatpush1.msra.mxu0 0.0
    %612 = vmatprep.subr.mxu0 0.0
    %613 = vmatpush1.msra.mxu0 0.0
    %614 = vmatprep.subr.mxu0 0.0
    %615 = vmatpush1.msra.mxu0 0.0
    %616 = vmatprep.subr.mxu0 0.0
    %617 = vmatpush1.msra.mxu0 0.0
    %618 = vmatprep.subr.mxu0 0.0
    %619 = vmatpush1.msra.mxu0 0.0
    %620 = vmatprep.subr.mxu0 0.0
    %621 = vmatpush1.msra.mxu0 0.0
    %622 = vmatprep.subr.mxu0 0.0
    %623 = vmatpush1.msra.mxu0 0.0
    %624 = vmatprep.subr.mxu0 0.0
    %625 = vmatpush1.msra.mxu0 0.0
    %626 = vmatprep.subr.mxu0 0.0
    %627 = vmatpush1.msra.mxu0 0.0
    %628 = vmatprep.subr.mxu0 0.0
    %629 = vmatpush1.msra.mxu0 0.0
    %630 = vmatprep.subr.mxu0 0.0
    %631 = vmatpush1.msra.mxu0 0.0
    %632 = vmatprep.subr.mxu0 0.0
    %633 = vmatpush1.msra.mxu0 0.0
    %634 = vmatprep.subr.mxu0 0.0
    %635 = vmatpush1.msra.mxu0 0.0
    %636 = vmatprep.subr.mxu0 0.0
    %637 = vmatpush1.msra.mxu0 0.0
    %638 = vmatprep.subr.mxu0 0.0
    %639 = vmatpush1.msra.mxu0 0.0
    %640 = vmatprep.subr.mxu0 0.0
    %641 = vmatpush1.msra.mxu0 0.0
    %642 = vmatprep.subr.mxu0 0.0
    %643 = vmatpush1.msra.mxu0 0.0
    %644 = vmatprep.subr.mxu0 0.0
    %645 = vmatpush1.msra.mxu0 0.0
    %646 = vmatprep.subr.mxu0 0.0
    %647 = vmatpush1.msra.mxu0 0.0
    %648 = vmatprep.subr.mxu0 0.0
    %649 = vmatpush1.msra.mxu0 0.0
    %650 = vmatprep.subr.mxu0 0.0
    %651 = vmatpush1.msra.mxu0 0.0
    %652 = vmatprep.subr.mxu0 0.0
    %653 = vmatpush1.msra.mxu0 0.0
    %654 = vmatprep.subr.mxu0 0.0
    %655 = vmatpush1.msra.mxu0 0.0
    %656 = vmatprep.subr.mxu0 0.0
    %657 = vmatpush1.msra.mxu0 0.0
    %658 = vmatprep.subr.mxu0 0.0
    %659 = vmatpush1.msra.mxu0 0.0
    %660 = vmatprep.subr.mxu0 0.0
    %661 = vmatpush1.msra.mxu0 0.0
    %662 = vmatprep.subr.mxu0 0.0
    %663 = vmatpush1.msra.mxu0 0.0
    %664 = vmatprep.subr.mxu0 0.0
    %665 = vmatpush1.msra.mxu0 0.0
    %666 = vmatprep.mubr.f32.mxu0 0.0
    %667 = vmatmul.mubr.f32.gmra.mrb[0].mxu0 %v600
    %v668 = vpop.f32.mrb[0].mxu0
    %v669 = vadd.f32 0.0, %v668
    %v670 = vpop.f32.mrb[0].mxu0
    %671 = vdwg.mxu0
    %v680 = vsel %vm271, %v548, %v541
    %v681 = vsel %vm273, %v555, %v680
    %v682 = vsel %vm275, %v562, %v681
    %v683 = vsel %vm277, %v569, %v682
    %v684 = vsel %vm279, %v576, %v683
    %v685 = vsel %vm281, %v583, %v684
    %v686 = vsel %vm283, %v590, %v685
    %v687 = vsel %vm204, %v686, 0
    %689 = vmatprep.subr.mxu0 0.0
    %690 = vmatpush1.msra.mxu0 %v591
    %691 = vmatprep.subr.mxu0 0.0
    %692 = vmatpush1.msra.mxu0 %v592
    %693 = vmatprep.subr.mxu0 0.0
    %694 = vmatpush1.msra.mxu0 %v593
    %695 = vmatprep.subr.mxu0 0.0
    %696 = vmatpush1.msra.mxu0 %v594
    %697 = vmatprep.subr.mxu0 0.0
    %698 = vmatpush1.msra.mxu0 0.0
    %699 = vmatprep.subr.mxu0 0.0
    %700 = vmatpush1.msra.mxu0 0.0
    %701 = vmatprep.subr.mxu0 0.0
    %702 = vmatpush1.msra.mxu0 0.0
    %703 = vmatprep.subr.mxu0 0.0
    %704 = vmatpush1.msra.mxu0 0.0
    %705 = vmatprep.subr.mxu0 0.0
    %706 = vmatpush1.msra.mxu0 0.0
    %707 = vmatprep.subr.mxu0 0.0
    %708 = vmatpush1.msra.mxu0 0.0
    %709 = vmatprep.subr.mxu0 0.0
    %710 = vmatpush1.msra.mxu0 0.0
    %711 = vmatprep.subr.mxu0 0.0
    %712 = vmatpush1.msra.mxu0 0.0
    %713 = vmatprep.subr.mxu0 0.0
    %714 = vmatpush1.msra.mxu0 0.0
    %715 = vmatprep.subr.mxu0 0.0
    %716 = vmatpush1.msra.mxu0 0.0
    %717 = vmatprep.subr.mxu0 0.0
    %718 = vmatpush1.msra.mxu0 0.0
    %719 = vmatprep.subr.mxu0 0.0
    %720 = vmatpush1.msra.mxu0 0.0
    %721 = vmatprep.subr.mxu0 0.0
    %722 = vmatpush1.msra.mxu0 0.0
    %723 = vmatprep.subr.mxu0 0.0
    %724 = vmatpush1.msra.mxu0 0.0
    %725 = vmatprep.subr.mxu0 0.0
    %726 = vmatpush1.msra.mxu0 0.0
    %727 = vmatprep.subr.mxu0 0.0
    %728 = vmatpush1.msra.mxu0 0.0
    %729 = vmatprep.subr.mxu0 0.0
    %730 = vmatpush1.msra.mxu0 0.0
    %731 = vmatprep.subr.mxu0 0.0
    %732 = vmatpush1.msra.mxu0 0.0
    %733 = vmatprep.subr.mxu0 0.0
    %734 = vmatpush1.msra.mxu0 0.0
    %735 = vmatprep.subr.mxu0 0.0
    %736 = vmatpush1.msra.mxu0 0.0
    %737 = vmatprep.subr.mxu0 0.0
    %738 = vmatpush1.msra.mxu0 0.0
    %739 = vmatprep.subr.mxu0 0.0
    %740 = vmatpush1.msra.mxu0 0.0
    %741 = vmatprep.subr.mxu0 0.0
    %742 = vmatpush1.msra.mxu0 0.0
    %743 = vmatprep.subr.mxu0 0.0
    %744 = vmatpush1.msra.mxu0 0.0
    %745 = vmatprep.subr.mxu0 0.0
    %746 = vmatpush1.msra.mxu0 0.0
    %747 = vmatprep.subr.mxu0 0.0
    %748 = vmatpush1.msra.mxu0 0.0
    %749 = vmatprep.subr.mxu0 0.0
    %750 = vmatpush1.msra.mxu0 0.0
    %751 = vmatprep.subr.mxu0 0.0
    %752 = vmatpush1.msra.mxu0 0.0
    %753 = vmatprep.mubr.f32.mxu0 0.0
    %754 = vmatmul.mubr.f32.gmra.mrb[0].mxu0 %v687
    %v755 = vpop.f32.mrb[0].mxu0
    %v756 = vadd.f32 %v669, %v755
    %v757 = vpop.f32.mrb[0].mxu0
    %758 = vdwg.mxu0
    %v759 = vtanh.pop %v756
    %760 = vst [vmem:[#allocation10] sm:$0xff] %v759
    %v762 = vsel %vm204, %v686, 0.0
    %763 = vst [vmem:[#allocation11] sm:$0xff] %v762
    %v764 = vlaneseq
    %v765 = vshrl.u32 %v764, 7
    %v766 = vsub.s32 %v238, %v765
    %v767 = vrot.slane %v490, %v766
    %v768 = vlaneseq
    %v769 = vshrl.u32 %v768, 7
    %v770 = vsub.s32 %v238, %v769
    %v771 = vrot.slane %v495, %v770
    %v772 = vlaneseq
    %v773 = vshrl.u32 %v772, 7
    %v774 = vsub.s32 %v238, %v773
    %v775 = vrot.slane %v500, %v774
    %v776 = vlaneseq
    %v777 = vshrl.u32 %v776, 7
    %v778 = vsub.s32 %v238, %v777
    %v779 = vrot.slane %v505, %v778
    %v780 = vlaneseq
    %v781 = vshrl.u32 %v780, 7
    %v782 = vsub.s32 %v238, %v781
    %v783 = vrot.slane %v510, %v782
    %v784 = vlaneseq
    %v785 = vshrl.u32 %v784, 7
    %v786 = vsub.s32 %v238, %v785
    %v787 = vrot.slane %v515, %v786
    %v788 = vlaneseq
    %v789 = vshrl.u32 %v788, 7
    %v790 = vsub.s32 %v238, %v789
    %v791 = vrot.slane %v520, %v790
    %v792 = vlaneseq
    %v793 = vshrl.u32 %v792, 7
    %v794 = vsub.s32 %v238, %v793
    %v795 = vrot.slane %v525, %v794
    %v796 = vsel %vm271, %v771, %v767
    %v797 = vsel %vm273, %v775, %v796
    %v798 = vsel %vm275, %v779, %v797
    %v799 = vsel %vm277, %v783, %v798
    %v800 = vsel %vm279, %v787, %v799
    %v801 = vsel %vm281, %v791, %v800
    %v802 = vsel %vm283, %v795, %v801
    %v804 = vsel %vm286, %v802, 0.0
    %805 = vst [vmem:[#allocation13] sm:$0xff] %v804
    // Predicated region
    $region42: #{tpu_custom_call.1} parent=1 // pred_check
      _
    $region43: #{tpu_custom_call.1} parent=1 // pred_check_branch
      %807 = sbr.rel (0) target = $region45
    $region44: #{tpu_custom_call.1} parent=1 // pred_region
      %s809 = ssub.s32 128, 128
      %810 = vsyncadd [#allocation4], %s809
      %s812 = sshll.u32 [#allocation10], 4
      %s813 = int_to_ptr.vmem [resolvable:$true] %s812
      %815 = dma.vmem_to_hbm [thread:$0]  %s813, 128, %s6, [#allocation4]
    $region45: #{tpu_custom_call.1} parent=1 // pred_fallthru
      _
    // Predicated region
    $region46: #{tpu_custom_call.1} parent=1 // pred_check
      _
    $region47: #{tpu_custom_call.1} parent=1 // pred_check_branch
      %817 = sbr.rel (0) target = $region49
    $region48: #{tpu_custom_call.1} parent=1 // pred_region
      %s819 = ssub.s32 128, 128
      %820 = vsyncadd [#allocation12], %s819
      %s822 = sshll.u32 [#allocation11], 4
      %s823 = int_to_ptr.vmem [resolvable:$true] %s822
      %825 = dma.vmem_to_hbm [thread:$0]  %s823, 128, %s7, [#allocation12]
    $region49: #{tpu_custom_call.1} parent=1 // pred_fallthru
      _
    // Predicated region
    $region50: #{tpu_custom_call.1} parent=1 // pred_check
      _
    $region51: #{tpu_custom_call.1} parent=1 // pred_check_branch
      %827 = sbr.rel (0) target = $region53
    $region52: #{tpu_custom_call.1} parent=1 // pred_region
      %s829 = ssub.s32 128, 128
      %830 = vsyncadd [#allocation12], %s829
      %s832 = sshll.u32 [#allocation13], 4
      %s833 = int_to_ptr.vmem [resolvable:$true] %s832
      %835 = dma.vmem_to_hbm [thread:$0]  %s833, 128, %s8, [#allocation12]
    $region53: #{tpu_custom_call.1} parent=1 // pred_fallthru
      _
    // Predicated region
    $region54: #{tpu_custom_call.1} parent=1 // pred_check
      _
    $region55: #{tpu_custom_call.1} parent=1 // pred_check_branch
      %837 = sbr.rel (0) target = $region57
    $region56: #{tpu_custom_call.1} parent=1 // pred_region
      %838 = dma.done [#allocation4], 128
    $region57: #{tpu_custom_call.1} parent=1 // pred_fallthru
      _
    // Predicated region
    $region58: #{tpu_custom_call.1} parent=1 // pred_check
      _
    $region59: #{tpu_custom_call.1} parent=1 // pred_check_branch
      %840 = sbr.rel (0) target = $region61
    $region60: #{tpu_custom_call.1} parent=1 // pred_region
      %841 = dma.done [#allocation12], 128
    $region61: #{tpu_custom_call.1} parent=1 // pred_fallthru
      _
    // Predicated region
    $region62: #{tpu_custom_call.1} parent=1 // pred_check
      _
    $region63: #{tpu_custom_call.1} parent=1 // pred_check_branch
      %843 = sbr.rel (0) target = $region65
    $region64: #{tpu_custom_call.1} parent=1 // pred_region
      %844 = dma.done [#allocation12], 128
    $region65: #{tpu_custom_call.1} parent=1 // pred_fallthru
      _
    %845 = vsyncpa [#allocation3], 1
    %846 = vsyncpa [#allocation6], 1
    %847 = vsyncpa [#allocation9], 1
    %848 = vsyncpa [#allocation4], 1
    %849 = vsyncpa [#allocation12], 1

</llo_original>
